<compile_context>
chip_gen: v6e
topology: v6e:2x2x1
jax: 0.10.0
libtpu: 0.0.40
codegen_flags: <defaults>
</compile_context>

<pallas_src>
import functools
import math

import jax
import jax.numpy as jnp
from jax import lax
from jax.experimental import pallas as pl
from jax.experimental.pallas import tpu as pltpu


def _vmem_limit_bytes():
    """Scoped-VMEM budget derived from physical capacity (v7x: 64 MiB, v5e/v6e: 128 MiB)."""
    cap = 128 * 1024 * 1024
    try:
        info = pltpu.get_tpu_info()
        cap = int(getattr(info, "vmem_capacity_bytes", cap) or cap)
    except Exception:
        pass
    return min((cap * 3) // 4, 96 * 1024 * 1024)


def _pick_tile(total, preferred):
    """Largest divisor of `total` <= preferred (prefer multiples of 8 for sublane tiling)."""
    if total <= preferred:
        return total
    for t in range(preferred, 7, -1):
        if total % t == 0 and t % 8 == 0:
            return t
    for t in range(preferred, 0, -1):
        if total % t == 0:
            return t
    # TODO(synk): pad / mask a ragged tail instead of falling back to a single full tile.
    return total


# -----------------------------------------------------------------------------
# Kernel 1: fused c_attn (Conv1D: y = x @ W + b) + head split.
# Writes Q (B, H, T, D) (scale pre-folded into W/b) and present (2, B, H, T, D) directly.
# -----------------------------------------------------------------------------
def _qkv_proj_kernel(x_ref, w_ref, b_ref, q_ref, present_ref, *, n_head, compute_dtype):
    x = x_ref[0]                                       # (TP, C)
    C = x.shape[-1]
    D = C // n_head

    qkv = jnp.dot(x.astype(compute_dtype), w_ref[...],
                  preferred_element_type=jnp.float32) + b_ref[...]     # (TP, 3C) f32

    # Static per-head lane slices; 1/sqrt(D) already folded into the Q columns of W/b.
    for h in range(n_head):
        q_ref[0, h] = qkv[:, h * D:(h + 1) * D].astype(q_ref.dtype)
        present_ref[0, 0, h] = qkv[:, C + h * D:C + (h + 1) * D].astype(present_ref.dtype)
        present_ref[1, 0, h] = qkv[:, 2 * C + h * D:2 * C + (h + 1) * D].astype(present_ref.dtype)


# -----------------------------------------------------------------------------
# Kernel 2: flash attention (online softmax, all heads per step, causal tile/DMA skip)
# fused with c_proj. grid = (B, T//TQ, T//TK); kv axis is the accumulation axis.
# -----------------------------------------------------------------------------
def _flash_attn_proj_kernel(q_ref, k_ref, v_ref, wp_ref, bp_ref, o_ref,
                            m_ref, l_ref, acc_ref, merged_ref, *,
                            tq, tk, compute_dtype, approx_recip):
    qi = pl.program_id(1)
    ki = pl.program_id(2)
    nk = pl.num_programs(2)
    n_head, _, D = q_ref.shape

    @pl.when(ki == 0)
    def _init():
        m_ref[...] = jnp.full(m_ref.shape, -jnp.inf, dtype=m_ref.dtype)
        l_ref[...] = jnp.zeros(l_ref.shape, dtype=l_ref.dtype)
        acc_ref[...] = jnp.zeros(acc_ref.shape, dtype=acc_ref.dtype)

    q_start = qi * tq
    k_start = ki * tk

    def _tile(apply_mask):
        if apply_mask:
            row = q_start + lax.broadcasted_iota(jnp.int32, (tq, tk), 0)
            col = k_start + lax.broadcasted_iota(jnp.int32, (tq, tk), 1)
            keep = col <= row

        def head_body(h, carry):
            q = q_ref[h].astype(compute_dtype)                         # (TQ, D), pre-scaled
            k = k_ref[h].astype(compute_dtype)                         # (TK, D)
            v = v_ref[h].astype(compute_dtype)                         # (TK, D)

            # q @ k^T without materializing a transpose.
            s = lax.dot_general(q, k, (((1,), (1,)), ((), ())),
                                preferred_element_type=jnp.float32)    # (TQ, TK)
            if apply_mask:
                # HF GPT-2 causal mask: masked logits are exactly -10000.
                s = jnp.where(keep, s, -10000.0)

            m_prev = m_ref[h]
            m_new = jnp.maximum(m_prev, jnp.max(s, axis=-1, keepdims=True))
            alpha = jnp.exp(m_prev - m_new)
            p = jnp.exp(s - m_new)
            l_ref[h] = alpha * l_ref[h] + jnp.sum(p, axis=-1, keepdims=True)
            acc_ref[h] = alpha * acc_ref[h] + jnp.dot(
                p.astype(compute_dtype), v, preferred_element_type=jnp.float32)
            m_ref[h] = m_new
            return carry

        lax.fori_loop(0, n_head, head_body, 0)

    # Tile classification (tiles strictly above the diagonal are skipped entirely:
    # exp(-10000 - m) underflows to 0 in f32, matching the reference softmax).
    fully_below = (k_start + (tk - 1)) <= q_start          # no mask needed
    in_range = k_start <= (q_start + (tq - 1))             # touches the causal region

    @pl.when(fully_below)
    def _no_mask():
        _tile(False)

    @pl.when(jnp.logical_and(in_range, jnp.logical_not(fully_below)))
    def _with_mask():
        _tile(True)

    # Epilogue: normalize each head, merge heads lane-dense into (TQ, C), then one
    # full-depth c_proj matmul against the resident (C, C) w_proj.
    @pl.when(ki == nk - 1)
    def _epilogue():
        for h in range(n_head):
            acc_h = acc_ref[h]
            l_h = l_ref[h]
            if approx_recip:
                out_h = acc_h * pl.reciprocal(l_h, approx=True)
            else:
                out_h = acc_h / l_h
            merged_ref[:, h * D:(h + 1) * D] = out_h.astype(merged_ref.dtype)
        proj = jnp.dot(merged_ref[...], wp_ref[...],
                       preferred_element_type=jnp.float32)             # (TQ, C)
        o_ref[...] = (proj + bp_ref[...]).astype(o_ref.dtype)


# -----------------------------------------------------------------------------
# Wrapper
# -----------------------------------------------------------------------------
def gpt2_attention(x, w_attn, b_attn, w_proj, b_proj, *, n_head, scale=True,
                   compute_dtype=jnp.float32, q_tile=128, kv_tile=256, proj_tile=256):
    """x: (B, T, C). Returns (a, present) like the torch module (no past / extra masks)."""
    B, T, C = x.shape
    assert C % n_head == 0
    D = C // n_head

    TP = _pick_tile(T, proj_tile)
    TQ = _pick_tile(T, q_tile)
    TK = _pick_tile(T, kv_tile)
    NQ, NK = T // TQ, T // TK

    vmem_limit = _vmem_limit_bytes()
    approx_recip = compute_dtype != jnp.float32     # exact normalization on the f32 path

    # Fold 1/sqrt(D) into the Q columns of the c_attn weight/bias (no in-kernel scaling).
    if scale:
        col_scale = jnp.concatenate([
            jnp.full((C,), 1.0 / math.sqrt(D), dtype=jnp.float32),
            jnp.ones((2 * C,), dtype=jnp.float32)])
        w_attn = w_attn * col_scale
        b_attn = b_attn * col_scale
    w_attn_c = w_attn.astype(compute_dtype)
    b_attn_f32 = b_attn.astype(jnp.float32)
    w_proj_c = w_proj.astype(compute_dtype)
    b_proj_f32 = b_proj.astype(jnp.float32)

    # ---- Kernel 1: qkv projection; K/V written straight into the stacked present layout ----
    k1 = functools.partial(_qkv_proj_kernel, n_head=n_head, compute_dtype=compute_dtype)
    q, present = pl.pallas_call(
        k1,
        out_shape=(
            jax.ShapeDtypeStruct((B, n_head, T, D), compute_dtype),    # Q (pre-scaled)
            jax.ShapeDtypeStruct((2, B, n_head, T, D), x.dtype),       # present = (K, V)
        ),
        grid_spec=pltpu.PrefetchScalarGridSpec(
            num_scalar_prefetch=0,
            grid=(B, T // TP),
            in_specs=[
                pl.BlockSpec((1, TP, C), lambda b, t: (b, t, 0)),
                pl.BlockSpec((C, 3 * C), lambda b, t: (0, 0)),
                pl.BlockSpec((1, 3 * C), lambda b, t: (0, 0)),
            ],
            out_specs=[
                pl.BlockSpec((1, n_head, TP, D), lambda b, t: (b, 0, t, 0)),
                pl.BlockSpec((2, 1, n_head, TP, D), lambda b, t: (0, b, 0, t, 0)),
            ],
        ),
        compiler_params=pltpu.CompilerParams(
            dimension_semantics=("parallel", "parallel"),
            vmem_limit_bytes=vmem_limit),
    )(x, w_attn_c, b_attn_f32)

    # ---- Kernel 2: flash attention over all heads per step + fused c_proj ----
    def _kv_block(qi, ki):
        # Clamp so above-diagonal steps reuse the previous block index => no new K/V DMA.
        return jnp.minimum(ki, (qi * TQ + (TQ - 1)) // TK)

    k2 = functools.partial(_flash_attn_proj_kernel, tq=TQ, tk=TK,
                           compute_dtype=compute_dtype, approx_recip=approx_recip)
    a = pl.pallas_call(
        k2,
        out_shape=jax.ShapeDtypeStruct((B, T, C), x.dtype),
        grid_spec=pltpu.PrefetchScalarGridSpec(
            num_scalar_prefetch=0,
            grid=(B, NQ, NK),
            in_specs=[
                # Q: all heads for this (b, qi).
                pl.BlockSpec((None, n_head, TQ, D),
                             lambda b, qi, ki: (b, 0, qi, 0)),
                # K = present[0], V = present[1] (same array passed twice).
                pl.BlockSpec((None, None, n_head, TK, D),
                             lambda b, qi, ki: (0, b, 0, _kv_block(qi, ki), 0)),
                pl.BlockSpec((None, None, n_head, TK, D),
                             lambda b, qi, ki: (1, b, 0, _kv_block(qi, ki), 0)),
                pl.BlockSpec((C, C), lambda b, qi, ki: (0, 0)),        # w_proj (resident)
                pl.BlockSpec((1, C), lambda b, qi, ki: (0, 0)),        # b_proj
            ],
            out_specs=pl.BlockSpec((None, TQ, C), lambda b, qi, ki: (b, qi, 0)),
            scratch_shapes=[
                pltpu.VMEM((n_head, TQ, 1), jnp.float32),   # running row max
                pltpu.VMEM((n_head, TQ, 1), jnp.float32),   # running row sum
                pltpu.VMEM((n_head, TQ, D), jnp.float32),   # unnormalized PV accumulator
                pltpu.VMEM((TQ, C), compute_dtype),         # merged heads (lane-dense)
            ],
        ),
        compiler_params=pltpu.CompilerParams(
            # b, qi parallel (megacore-shardable on v7x); kv axis is the accumulation axis.
            dimension_semantics=("parallel", "parallel", "arbitrary"),
            vmem_limit_bytes=vmem_limit),
    )(q, present, present, w_proj_c, b_proj_f32)

    return a, present


# -----------------------------------------------------------------------------
# Pure-JAX reference mirroring the torch forward.
# -----------------------------------------------------------------------------
def _reference(x, w_attn, b_attn, w_proj, b_proj, n_head, scale=True):
    B, T, C = x.shape
    D = C // n_head
    qkv = x @ w_attn + b_attn[0]
    q, k, v = jnp.split(qkv, 3, axis=-1)
    sh = lambda t: t.reshape(B, T, n_head, D).transpose(0, 2, 1, 3)    # (B,H,T,D)
    q, k, v = sh(q), sh(k), sh(v)
    w = jnp.einsum("bhqd,bhkd->bhqk", q, k)
    if scale:
        w = w / math.sqrt(D)
    b = jnp.tril(jnp.ones((T, T), jnp.float32))[None, None]
    w = w * b - 10000.0 * (1 - b)
    w = jax.nn.softmax(w, axis=-1)
    a = jnp.einsum("bhqk,bhkd->bhqd", w, v)
    a = a.transpose(0, 2, 1, 3).reshape(B, T, C)
    out = a @ w_proj + b_proj[0]
    present = jnp.stack([k, v], axis=0)
    return out, present


if __name__ == "__main__":
    # Small GPT-2-like config: batch=2, seq=8, hidden=32, heads=4 (head_dim=8).
    B, T, C, H = 2, 8, 32, 4

    key = jax.random.PRNGKey(0)
    k1, k2, k3, k4, k5 = jax.random.split(key, 5)

    x = jax.random.normal(k1, (B, T, C), dtype=jnp.float32)
    # Conv1D weights stored (in_features, out_features); non-zero biases to exercise adds.
    w_attn = 0.02 * jax.random.normal(k2, (C, 3 * C), dtype=jnp.float32)
    b_attn = 0.01 * jax.random.normal(k4, (1, 3 * C), dtype=jnp.float32)
    w_proj = 0.02 * jax.random.normal(k3, (C, C), dtype=jnp.float32)
    b_proj = 0.01 * jax.random.normal(k5, (1, C), dtype=jnp.float32)

    with jax.default_matmul_precision("highest"):
        ref_a, ref_present = _reference(x, w_attn, b_attn, w_proj, b_proj, H, scale=True)

    # f32 compute path (exact normalization; tight tolerance).
    a, present = gpt2_attention(x, w_attn, b_attn, w_proj, b_proj, n_head=H, scale=True,
                                compute_dtype=jnp.float32)
    jax.block_until_ready((a, present))
    assert a.shape == (B, T, C)
    assert present.shape == (2, B, H, T, C // H)
    assert jnp.allclose(a, ref_a, atol=2e-4, rtol=1e-3), "f32 output mismatch"
    assert jnp.allclose(present, ref_present, atol=2e-4, rtol=1e-3), "f32 present mismatch"

    # bf16 matmul operands with f32 accumulation: K/V (and hence present) intentionally
    # carry bf16 rounding error, so compare with bf16-appropriate tolerances.
    a_bf16, present_bf16 = gpt2_attention(x, w_attn, b_attn, w_proj, b_proj, n_head=H,
                                          scale=True, compute_dtype=jnp.bfloat16)
    jax.block_until_ready((a_bf16, present_bf16))
    assert jnp.allclose(a_bf16, ref_a, atol=3e-2, rtol=3e-2), "bf16 output mismatch"
    assert jnp.allclose(present_bf16, ref_present, atol=3e-2, rtol=3e-2), "bf16 present mismatch"

    print("KERNEL_OK")
</pallas_src>

<mosaic_0001>
module attributes {stable_mosaic.version = 11 : i64} {
  func.func @_qkv_proj_kernel(%arg0: i32, %arg1: i32, %arg2: memref<1x8x32xf32, #tpu.memory_space<vmem>>, %arg3: memref<32x96xf32, #tpu.memory_space<vmem>>, %arg4: memref<1x96xf32, #tpu.memory_space<vmem>>, %arg5: memref<1x4x8x8xf32, #tpu.memory_space<vmem>>, %arg6: memref<2x1x4x8x8xf32, #tpu.memory_space<vmem>>) attributes {dimension_semantics = [#tpu.dimension_semantics<parallel>, #tpu.dimension_semantics<parallel>], iteration_bounds = array<i64: 2, 1>, scalar_prefetch = 0 : i64, scratch_operands = 0 : i64, tpu.core_type = #tpu.core_type<tc>, window_params = [{transform_indices = @transform_0, window_bounds = array<i64: 1, 8, 32>}, {pipeline_mode = #tpu.pipeline_mode<synchronous>, transform_indices = @transform_1, window_bounds = array<i64: 32, 96>}, {pipeline_mode = #tpu.pipeline_mode<synchronous>, transform_indices = @transform_2, window_bounds = array<i64: 1, 96>}, {transform_indices = @transform_3, window_bounds = array<i64: 1, 4, 8, 8>}, {transform_indices = @transform_4, window_bounds = array<i64: 2, 1, 4, 8, 8>}]} {
    %c0 = arith.constant 0 : index
    %c0_0 = arith.constant 0 : index
    %c0_1 = arith.constant 0 : index
    %0 = vector.load %arg2[%c0, %c0_0, %c0_1] : memref<1x8x32xf32, #tpu.memory_space<vmem>>, vector<1x8x32xf32>
    %1 = vector.shape_cast %0 : vector<1x8x32xf32> to vector<8x32xf32>
    %c0_2 = arith.constant 0 : index
    %c0_3 = arith.constant 0 : index
    %2 = vector.load %arg3[%c0_2, %c0_3] : memref<32x96xf32, #tpu.memory_space<vmem>>, vector<32x96xf32>
    %cst = arith.constant dense<0.000000e+00> : vector<8x96xf32>
    %3 = tpu.matmul %1, %2, %cst {dimension_numbers = #tpu.dot_dimension_numbers<[1], [0], [0], [1], [0, 0, 1, 1], [], []>} : vector<8x32xf32>, vector<32x96xf32>, vector<8x96xf32> -> vector<8x96xf32>
    %c0_4 = arith.constant 0 : index
    %c0_5 = arith.constant 0 : index
    %4 = vector.load %arg4[%c0_4, %c0_5] : memref<1x96xf32, #tpu.memory_space<vmem>>, vector<1x96xf32>
    %5 = vector.broadcast %4 : vector<1x96xf32> to vector<8x96xf32>
    %6 = arith.addf %3, %5 : vector<8x96xf32>
    %7 = vector.extract_strided_slice %6 {offsets = [0, 0], sizes = [8, 8], strides = [1, 1]} : vector<8x96xf32> to vector<8x8xf32>
    %c0_6 = arith.constant 0 : index
    %c0_7 = arith.constant 0 : index
    %c0_8 = arith.constant 0 : index
    %c0_9 = arith.constant 0 : index
    %8 = vector.load %arg5[%c0_6, %c0_7, %c0_8, %c0_9] : memref<1x4x8x8xf32, #tpu.memory_space<vmem>>, vector<1x1x8x8xf32>
    %9 = vector.shape_cast %8 : vector<1x1x8x8xf32> to vector<8x8xf32>
    %10 = vector.shape_cast %7 : vector<8x8xf32> to vector<1x1x8x8xf32>
    tpu.vector_store %arg5[%c0_6, %c0_7, %c0_8, %c0_9], %10 {strides = array<i32>} : memref<1x4x8x8xf32, #tpu.memory_space<vmem>>, vector<1x1x8x8xf32>,
    %11 = vector.extract_strided_slice %6 {offsets = [0, 32], sizes = [8, 8], strides = [1, 1]} : vector<8x96xf32> to vector<8x8xf32>
    %c0_10 = arith.constant 0 : index
    %c0_11 = arith.constant 0 : index
    %c0_12 = arith.constant 0 : index
    %c0_13 = arith.constant 0 : index
    %c0_14 = arith.constant 0 : index
    %12 = vector.load %arg6[%c0_10, %c0_11, %c0_12, %c0_13, %c0_14] : memref<2x1x4x8x8xf32, #tpu.memory_space<vmem>>, vector<1x1x1x8x8xf32>
    %13 = vector.shape_cast %12 : vector<1x1x1x8x8xf32> to vector<8x8xf32>
    %14 = vector.shape_cast %11 : vector<8x8xf32> to vector<1x1x1x8x8xf32>
    tpu.vector_store %arg6[%c0_10, %c0_11, %c0_12, %c0_13, %c0_14], %14 {strides = array<i32>} : memref<2x1x4x8x8xf32, #tpu.memory_space<vmem>>, vector<1x1x1x8x8xf32>,
    %15 = vector.extract_strided_slice %6 {offsets = [0, 64], sizes = [8, 8], strides = [1, 1]} : vector<8x96xf32> to vector<8x8xf32>
    %c1 = arith.constant 1 : index
    %c0_15 = arith.constant 0 : index
    %c0_16 = arith.constant 0 : index
    %c0_17 = arith.constant 0 : index
    %c0_18 = arith.constant 0 : index
    %16 = vector.load %arg6[%c1, %c0_15, %c0_16, %c0_17, %c0_18] : memref<2x1x4x8x8xf32, #tpu.memory_space<vmem>>, vector<1x1x1x8x8xf32>
    %17 = vector.shape_cast %16 : vector<1x1x1x8x8xf32> to vector<8x8xf32>
    %18 = vector.shape_cast %15 : vector<8x8xf32> to vector<1x1x1x8x8xf32>
    tpu.vector_store %arg6[%c1, %c0_15, %c0_16, %c0_17, %c0_18], %18 {strides = array<i32>} : memref<2x1x4x8x8xf32, #tpu.memory_space<vmem>>, vector<1x1x1x8x8xf32>,
    %19 = vector.extract_strided_slice %6 {offsets = [0, 8], sizes = [8, 8], strides = [1, 1]} : vector<8x96xf32> to vector<8x8xf32>
    %c0_19 = arith.constant 0 : index
    %c1_20 = arith.constant 1 : index
    %c0_21 = arith.constant 0 : index
    %c0_22 = arith.constant 0 : index
    %20 = vector.load %arg5[%c0_19, %c1_20, %c0_21, %c0_22] : memref<1x4x8x8xf32, #tpu.memory_space<vmem>>, vector<1x1x8x8xf32>
    %21 = vector.shape_cast %20 : vector<1x1x8x8xf32> to vector<8x8xf32>
    %22 = vector.shape_cast %19 : vector<8x8xf32> to vector<1x1x8x8xf32>
    tpu.vector_store %arg5[%c0_19, %c1_20, %c0_21, %c0_22], %22 {strides = array<i32>} : memref<1x4x8x8xf32, #tpu.memory_space<vmem>>, vector<1x1x8x8xf32>,
    %23 = vector.extract_strided_slice %6 {offsets = [0, 40], sizes = [8, 8], strides = [1, 1]} : vector<8x96xf32> to vector<8x8xf32>
    %c0_23 = arith.constant 0 : index
    %c0_24 = arith.constant 0 : index
    %c1_25 = arith.constant 1 : index
    %c0_26 = arith.constant 0 : index
    %c0_27 = arith.constant 0 : index
    %24 = vector.load %arg6[%c0_23, %c0_24, %c1_25, %c0_26, %c0_27] : memref<2x1x4x8x8xf32, #tpu.memory_space<vmem>>, vector<1x1x1x8x8xf32>
    %25 = vector.shape_cast %24 : vector<1x1x1x8x8xf32> to vector<8x8xf32>
    %26 = vector.shape_cast %23 : vector<8x8xf32> to vector<1x1x1x8x8xf32>
    tpu.vector_store %arg6[%c0_23, %c0_24, %c1_25, %c0_26, %c0_27], %26 {strides = array<i32>} : memref<2x1x4x8x8xf32, #tpu.memory_space<vmem>>, vector<1x1x1x8x8xf32>,
    %27 = vector.extract_strided_slice %6 {offsets = [0, 72], sizes = [8, 8], strides = [1, 1]} : vector<8x96xf32> to vector<8x8xf32>
    %c1_28 = arith.constant 1 : index
    %c0_29 = arith.constant 0 : index
    %c1_30 = arith.constant 1 : index
    %c0_31 = arith.constant 0 : index
    %c0_32 = arith.constant 0 : index
    %28 = vector.load %arg6[%c1_28, %c0_29, %c1_30, %c0_31, %c0_32] : memref<2x1x4x8x8xf32, #tpu.memory_space<vmem>>, vector<1x1x1x8x8xf32>
    %29 = vector.shape_cast %28 : vector<1x1x1x8x8xf32> to vector<8x8xf32>
    %30 = vector.shape_cast %27 : vector<8x8xf32> to vector<1x1x1x8x8xf32>
    tpu.vector_store %arg6[%c1_28, %c0_29, %c1_30, %c0_31, %c0_32], %30 {strides = array<i32>} : memref<2x1x4x8x8xf32, #tpu.memory_space<vmem>>, vector<1x1x1x8x8xf32>,
    %31 = vector.extract_strided_slice %6 {offsets = [0, 16], sizes = [8, 8], strides = [1, 1]} : vector<8x96xf32> to vector<8x8xf32>
    %c0_33 = arith.constant 0 : index
    %c2 = arith.constant 2 : index
    %c0_34 = arith.constant 0 : index
    %c0_35 = arith.constant 0 : index
    %32 = vector.load %arg5[%c0_33, %c2, %c0_34, %c0_35] : memref<1x4x8x8xf32, #tpu.memory_space<vmem>>, vector<1x1x8x8xf32>
    %33 = vector.shape_cast %32 : vector<1x1x8x8xf32> to vector<8x8xf32>
    %34 = vector.shape_cast %31 : vector<8x8xf32> to vector<1x1x8x8xf32>
    tpu.vector_store %arg5[%c0_33, %c2, %c0_34, %c0_35], %34 {strides = array<i32>} : memref<1x4x8x8xf32, #tpu.memory_space<vmem>>, vector<1x1x8x8xf32>,
    %35 = vector.extract_strided_slice %6 {offsets = [0, 48], sizes = [8, 8], strides = [1, 1]} : vector<8x96xf32> to vector<8x8xf32>
    %c0_36 = arith.constant 0 : index
    %c0_37 = arith.constant 0 : index
    %c2_38 = arith.constant 2 : index
    %c0_39 = arith.constant 0 : index
    %c0_40 = arith.constant 0 : index
    %36 = vector.load %arg6[%c0_36, %c0_37, %c2_38, %c0_39, %c0_40] : memref<2x1x4x8x8xf32, #tpu.memory_space<vmem>>, vector<1x1x1x8x8xf32>
    %37 = vector.shape_cast %36 : vector<1x1x1x8x8xf32> to vector<8x8xf32>
    %38 = vector.shape_cast %35 : vector<8x8xf32> to vector<1x1x1x8x8xf32>
    tpu.vector_store %arg6[%c0_36, %c0_37, %c2_38, %c0_39, %c0_40], %38 {strides = array<i32>} : memref<2x1x4x8x8xf32, #tpu.memory_space<vmem>>, vector<1x1x1x8x8xf32>,
    %39 = vector.extract_strided_slice %6 {offsets = [0, 80], sizes = [8, 8], strides = [1, 1]} : vector<8x96xf32> to vector<8x8xf32>
    %c1_41 = arith.constant 1 : index
    %c0_42 = arith.constant 0 : index
    %c2_43 = arith.constant 2 : index
    %c0_44 = arith.constant 0 : index
    %c0_45 = arith.constant 0 : index
    %40 = vector.load %arg6[%c1_41, %c0_42, %c2_43, %c0_44, %c0_45] : memref<2x1x4x8x8xf32, #tpu.memory_space<vmem>>, vector<1x1x1x8x8xf32>
    %41 = vector.shape_cast %40 : vector<1x1x1x8x8xf32> to vector<8x8xf32>
    %42 = vector.shape_cast %39 : vector<8x8xf32> to vector<1x1x1x8x8xf32>
    tpu.vector_store %arg6[%c1_41, %c0_42, %c2_43, %c0_44, %c0_45], %42 {strides = array<i32>} : memref<2x1x4x8x8xf32, #tpu.memory_space<vmem>>, vector<1x1x1x8x8xf32>,
    %43 = vector.extract_strided_slice %6 {offsets = [0, 24], sizes = [8, 8], strides = [1, 1]} : vector<8x96xf32> to vector<8x8xf32>
    %c0_46 = arith.constant 0 : index
    %c3 = arith.constant 3 : index
    %c0_47 = arith.constant 0 : index
    %c0_48 = arith.constant 0 : index
    %44 = vector.load %arg5[%c0_46, %c3, %c0_47, %c0_48] : memref<1x4x8x8xf32, #tpu.memory_space<vmem>>, vector<1x1x8x8xf32>
    %45 = vector.shape_cast %44 : vector<1x1x8x8xf32> to vector<8x8xf32>
    %46 = vector.shape_cast %43 : vector<8x8xf32> to vector<1x1x8x8xf32>
    tpu.vector_store %arg5[%c0_46, %c3, %c0_47, %c0_48], %46 {strides = array<i32>} : memref<1x4x8x8xf32, #tpu.memory_space<vmem>>, vector<1x1x8x8xf32>,
    %47 = vector.extract_strided_slice %6 {offsets = [0, 56], sizes = [8, 8], strides = [1, 1]} : vector<8x96xf32> to vector<8x8xf32>
    %c0_49 = arith.constant 0 : index
    %c0_50 = arith.constant 0 : index
    %c3_51 = arith.constant 3 : index
    %c0_52 = arith.constant 0 : index
    %c0_53 = arith.constant 0 : index
    %48 = vector.load %arg6[%c0_49, %c0_50, %c3_51, %c0_52, %c0_53] : memref<2x1x4x8x8xf32, #tpu.memory_space<vmem>>, vector<1x1x1x8x8xf32>
    %49 = vector.shape_cast %48 : vector<1x1x1x8x8xf32> to vector<8x8xf32>
    %50 = vector.shape_cast %47 : vector<8x8xf32> to vector<1x1x1x8x8xf32>
    tpu.vector_store %arg6[%c0_49, %c0_50, %c3_51, %c0_52, %c0_53], %50 {strides = array<i32>} : memref<2x1x4x8x8xf32, #tpu.memory_space<vmem>>, vector<1x1x1x8x8xf32>,
    %51 = vector.extract_strided_slice %6 {offsets = [0, 88], sizes = [8, 8], strides = [1, 1]} : vector<8x96xf32> to vector<8x8xf32>
    %c1_54 = arith.constant 1 : index
    %c0_55 = arith.constant 0 : index
    %c3_56 = arith.constant 3 : index
    %c0_57 = arith.constant 0 : index
    %c0_58 = arith.constant 0 : index
    %52 = vector.load %arg6[%c1_54, %c0_55, %c3_56, %c0_57, %c0_58] : memref<2x1x4x8x8xf32, #tpu.memory_space<vmem>>, vector<1x1x1x8x8xf32>
    %53 = vector.shape_cast %52 : vector<1x1x1x8x8xf32> to vector<8x8xf32>
    %54 = vector.shape_cast %51 : vector<8x8xf32> to vector<1x1x1x8x8xf32>
    tpu.vector_store %arg6[%c1_54, %c0_55, %c3_56, %c0_57, %c0_58], %54 {strides = array<i32>} : memref<2x1x4x8x8xf32, #tpu.memory_space<vmem>>, vector<1x1x1x8x8xf32>,
    return
  }
  func.func @transform_0(%arg0: i32, %arg1: i32) -> (i32, i32, i32) {
    %c0_i32 = arith.constant 0 : i32
    %c0_i32_0 = arith.constant 0 : i32
    return %arg0, %arg1, %c0_i32 : i32, i32, i32
  }
  func.func @transform_1(%arg0: i32, %arg1: i32) -> (i32, i32) {
    %c0_i32 = arith.constant 0 : i32
    %c0_i32_0 = arith.constant 0 : i32
    %c0_i32_1 = arith.constant 0 : i32
    return %c0_i32, %c0_i32_0 : i32, i32
  }
  func.func @transform_2(%arg0: i32, %arg1: i32) -> (i32, i32) {
    %c0_i32 = arith.constant 0 : i32
    %c0_i32_0 = arith.constant 0 : i32
    %c0_i32_1 = arith.constant 0 : i32
    return %c0_i32, %c0_i32_0 : i32, i32
  }
  func.func @transform_3(%arg0: i32, %arg1: i32) -> (i32, i32, i32, i32) {
    %c0_i32 = arith.constant 0 : i32
    %c0_i32_0 = arith.constant 0 : i32
    %c0_i32_1 = arith.constant 0 : i32
    return %arg0, %c0_i32, %arg1, %c0_i32_0 : i32, i32, i32, i32
  }
  func.func @transform_4(%arg0: i32, %arg1: i32) -> (i32, i32, i32, i32, i32) {
    %c0_i32 = arith.constant 0 : i32
    %c0_i32_0 = arith.constant 0 : i32
    %c0_i32_1 = arith.constant 0 : i32
    %c0_i32_2 = arith.constant 0 : i32
    return %c0_i32, %arg0, %c0_i32_0, %arg1, %c0_i32_1 : i32, i32, i32, i32, i32
  }
}

</mosaic_0001>

<llo_original>
// kernel: tpu_custom_call.1
$region0: #{tpu_custom_call.1}
  #allocation0 [shape = 'u32[]', space=smem, size = 0x4, offset = 0x4, fixed_abs, tag = 'smem constant byte address 0x4 - core index']
  #allocation1 [shape = 'u32[144,128]{1,0:T(1,128)}', space=vmem, size = 0x12000, scoped, tag = 'internal scratch']
  #allocation10 [shape = 's32[]', space=sflag, size = 0x4, offset = 0, fixed_abs, tag = 'sflag constant byte address 0x0 - dummy sync flag']
  %s0 = inlined_call_operand.hbm [shape: f32[2,8,32], index: 0, kind: input, shape index: {}]
  %s1 = inlined_call_operand.hbm [shape: f32[32,96], index: 1, kind: input, shape index: {}]
  %s2 = inlined_call_operand.vmem [shape: f32[1,96], index: 2, kind: input, shape index: {}]
  %s3 = inlined_call_operand.hbm [shape: f32[2,4,8,8], index: 3, kind: output, shape index: {0}]
  %s4 = inlined_call_operand.hbm [shape: f32[2,2,4,8,8], index: 4, kind: output, shape index: {1}]
  %5 = xla_tuple %s3, %s4
  %s6 = sld [smem:[#allocation0]]
  $region61: #{tpu_custom_call.1} parent=0
    _
  %s8 = ssub.s32 1, %s6
  %s9 = scalar_select 0, %s8, %s6
  $region1: #{tpu_custom_call.1} parent=0
    #allocation2 [shape = 'u8[8192]{0}', space=vmem, size = 0x2000, scoped, tag = 'input window, operand 0']
    #allocation3 [shape = 's32[2]{0}', space=sflag, size = 0x8, scoped, tag = 'scoped memory for tpu_custom_call.1']
    #allocation4 [shape = 's32[2]{0}', space=sflag, size = 0x8, scoped, tag = 'scoped memory for tpu_custom_call.1']
    #allocation5 [shape = 'u8[16384]{0}', space=vmem, size = 0x4000, scoped, tag = 'input window, operand 1, single buffered']
    #allocation6 [shape = 's32[1]{0}', space=sflag, size = 0x4, scoped, tag = 'scoped memory for tpu_custom_call.1']
    #allocation7 [shape = 'u8[32768]{0}', space=vmem, size = 0x8000, scoped, tag = 'output window, operand 0']
    #allocation8 [shape = 'u8[65536]{0}', space=vmem, size = 0x10000, scoped, tag = 'output window, operand 1']
    #allocation9 [shape = 's32[2]{0}', space=sflag, size = 0x8, scoped, tag = 'scoped memory for tpu_custom_call.1']
    %10 = vsyncpa [#allocation3], 0
    %s11 = scalar_lea.sflag [#allocation3], 1
    %12 = vsyncpa %s11, 0
    %13 = vsyncpa [#allocation6], 0
    %14 = vsyncpa [#allocation4], 0
    %s15 = scalar_lea.sflag [#allocation4], 1
    %16 = vsyncpa %s15, 0
    %17 = vsyncpa [#allocation9], 0
    %s18 = scalar_lea.sflag [#allocation9], 1
    %19 = vsyncpa %s18, 0
    loop: start=0, step=1, limit=4
    $region2: #{tpu_custom_call.1} parent=1 // loop_pre_header
      _
    $region3: #{tpu_custom_call.1} parent=1 // loop_header
      %s21 = sphi 0, %s25
      %p22 = scmp.ge.s32.totalorder %s21, 4
      %s28 = sphi 0, %s40
      %s29 = sphi 0, %s36
      %s30 = sphi 0, %s28
      %s31 = sphi 0, %s29
      %s32 = sphi 0, %s30
      %s33 = sphi 0, %s31
      %s45 = sphi 0, %s47
      %s48 = sphi 0, %s45
      %s49 = sphi 0, %s48
      %s65 = sphi 0, %s49
      %s69 = sphi 0, %s69
      %s71 = sphi 0, %s69
      %s72 = sphi 0, %s71
      %s86 = sphi 0, %s72
      %s90 = sphi 0, %s90
      %s92 = sphi 0, %s90
      %s93 = sphi 0, %s92
      %s107 = sphi 0, %s93
      %s115 = sphi 0, %s117
      %s118 = sphi 0, %s115
      %s119 = sphi 0, %s118
      %s135 = sphi 0, %s119
      %s143 = sphi 0, %s145
      %s146 = sphi 0, %s143
      %s147 = sphi 0, %s146
      %s163 = sphi 0, %s147
    $region4: #{tpu_custom_call.1} parent=1 // loop_header_branch
      %24 = sbr.rel (%p22) target = $region8
    $region5: #{tpu_custom_call.1} parent=1 // loop_body
      %s26 = ssub.s32 %s21, 1
      %s27 = ssub.s32 %s21, 2
      %s34 = sadd.s32 1, %s29
      %p35 = scmp.ge.s32.totalorder %s34, 1
      %s36 = scalar_select %p35, 0, %s34
      %s37 = sadd.s32 1, %s28
      %s38 = scalar_select %p35, %s37, %s28
      %p39 = scmp.ge.s32.totalorder %s38, 2
      %s40 = scalar_select %p39, 0, %s38
      %s41 = ssub.s32 %s28, %s40
      %s42 = ssub.s32 %s29, %s36
      %s43 = sor.u32 %s41, %s42
      %p44 = scmp.eq.s32.totalorder %s43, 0
      %s46 = sadd.s32 %s45, 1
      %s47 = scalar_select %p44, %s45, %s46
      %p50 = pneg %p44
      %p51 = scmp.eq.s32.totalorder %s21, 1
      %p52 = por %p50, %p51
      %p53 = scmp.ne.s32.totalorder %s45, %s48
      %p54 = scmp.eq.s32.totalorder %s21, 0
      %p55 = por %p53, %p54
      %p56 = scmp.ne.s32.totalorder %s45, %s48
      %p57 = scmp.eq.s32.totalorder %s26, 1
      %p58 = por %p56, %p57
      %p59 = scmp.ne.s32.totalorder %s48, %s49
      %p60 = scmp.eq.s32.totalorder %s26, 0
      %p61 = por %p59, %p60
      %p62 = scmp.ne.s32.totalorder %s48, %s49
      %p63 = scmp.eq.s32.totalorder %s27, 1
      %p64 = por %p62, %p63
      %p66 = scmp.ne.s32.totalorder %s49, %s65
      %p67 = scmp.eq.s32.totalorder %s27, 0
      %p68 = por %p66, %p67
      %s70 = sadd.s32 %s69, 1
      %p73 = scmp.eq.s32.totalorder %s21, 1
      %p74 = scmp.ne.s32.totalorder %s69, %s71
      %p75 = scmp.eq.s32.totalorder %s21, 0
      %p76 = por %p74, %p75
      %p77 = scmp.ne.s32.totalorder %s69, %s71
      %p78 = scmp.eq.s32.totalorder %s26, 1
      %p79 = por %p77, %p78
      %p80 = scmp.ne.s32.totalorder %s71, %s72
      %p81 = scmp.eq.s32.totalorder %s26, 0
      %p82 = por %p80, %p81
      %p83 = scmp.ne.s32.totalorder %s71, %s72
      %p84 = scmp.eq.s32.totalorder %s27, 1
      %p85 = por %p83, %p84
      %p87 = scmp.ne.s32.totalorder %s72, %s86
      %p88 = scmp.eq.s32.totalorder %s27, 0
      %p89 = por %p87, %p88
      %s91 = sadd.s32 %s90, 1
      %p94 = scmp.eq.s32.totalorder %s21, 1
      %p95 = scmp.ne.s32.totalorder %s90, %s92
      %p96 = scmp.eq.s32.totalorder %s21, 0
      %p97 = por %p95, %p96
      %p98 = scmp.ne.s32.totalorder %s90, %s92
      %p99 = scmp.eq.s32.totalorder %s26, 1
      %p100 = por %p98, %p99
      %p101 = scmp.ne.s32.totalorder %s92, %s93
      %p102 = scmp.eq.s32.totalorder %s26, 0
      %p103 = por %p101, %p102
      %p104 = scmp.ne.s32.totalorder %s92, %s93
      %p105 = scmp.eq.s32.totalorder %s27, 1
      %p106 = por %p104, %p105
      %p108 = scmp.ne.s32.totalorder %s93, %s107
      %p109 = scmp.eq.s32.totalorder %s27, 0
      %p110 = por %p108, %p109
      %s111 = ssub.s32 %s28, %s40
      %s112 = ssub.s32 %s29, %s36
      %s113 = sor.u32 %s111, %s112
      %p114 = scmp.eq.s32.totalorder %s113, 0
      %s116 = sadd.s32 %s115, 1
      %s117 = scalar_select %p114, %s115, %s116
      %p120 = pneg %p114
      %p121 = scmp.eq.s32.totalorder %s21, 1
      %p122 = por %p120, %p121
      %p123 = scmp.ne.s32.totalorder %s115, %s118
      %p124 = scmp.eq.s32.totalorder %s21, 0
      %p125 = por %p123, %p124
      %p126 = scmp.ne.s32.totalorder %s115, %s118
      %p127 = scmp.eq.s32.totalorder %s26, 1
      %p128 = por %p126, %p127
      %p129 = scmp.ne.s32.totalorder %s118, %s119
      %p130 = scmp.eq.s32.totalorder %s26, 0
      %p131 = por %p129, %p130
      %p132 = scmp.ne.s32.totalorder %s118, %s119
      %p133 = scmp.eq.s32.totalorder %s27, 1
      %p134 = por %p132, %p133
      %p136 = scmp.ne.s32.totalorder %s119, %s135
      %p137 = scmp.eq.s32.totalorder %s27, 0
      %p138 = por %p136, %p137
      %s139 = ssub.s32 %s28, %s40
      %s140 = ssub.s32 %s29, %s36
      %s141 = sor.u32 %s139, %s140
      %p142 = scmp.eq.s32.totalorder %s141, 0
      %s144 = sadd.s32 %s143, 1
      %s145 = scalar_select %p142, %s143, %s144
      %p148 = pneg %p142
      %p149 = scmp.eq.s32.totalorder %s21, 1
      %p150 = por %p148, %p149
      %p151 = scmp.ne.s32.totalorder %s143, %s146
      %p152 = scmp.eq.s32.totalorder %s21, 0
      %p153 = por %p151, %p152
      %p154 = scmp.ne.s32.totalorder %s143, %s146
      %p155 = scmp.eq.s32.totalorder %s26, 1
      %p156 = por %p154, %p155
      %p157 = scmp.ne.s32.totalorder %s146, %s147
      %p158 = scmp.eq.s32.totalorder %s26, 0
      %p159 = por %p157, %p158
      %p160 = scmp.ne.s32.totalorder %s146, %s147
      %p161 = scmp.eq.s32.totalorder %s27, 1
      %p162 = por %p160, %p161
      %p164 = scmp.ne.s32.totalorder %s147, %s163
      %p165 = scmp.eq.s32.totalorder %s27, 0
      %p166 = por %p164, %p165
      %p167 = scmp.le.s32.totalorder 1, %s21
      %p168 = scmp.lt.s32.totalorder %s21, 3
      %p169 = pnand %p167, %p168
      %p170 = pneg %p169
      // Predicated region
      $region9: #{tpu_custom_call.1} parent=5 // pred_check
        _
      $region10: #{tpu_custom_call.1} parent=5 // pred_check_branch
        %172 = sbr.rel (%p169) target = $region12
      $region11: #{tpu_custom_call.1} parent=5 // pred_region
        %s173 = ssub.s32 %s21, 1
        // Predicated region
        $region13: #{tpu_custom_call.1} parent=11 // pred_check
          %p174 = pneg %p82
        $region14: #{tpu_custom_call.1} parent=11 // pred_check_branch
          %176 = sbr.rel (%p174) target = $region16
        $region15: #{tpu_custom_call.1} parent=11 // pred_region
          %s178 = ssub.s32 512, 512
          %179 = vsyncadd [#allocation6], %s178
          %s180 = sshll.u32 [#allocation5], 4
          %s181 = int_to_ptr.vmem [resolvable:$true] %s180
          %186 = dma.hbm_to_vmem [thread:$0]  %s1, 512, %s181, [#allocation6], 128, 128, 8
        $region16: #{tpu_custom_call.1} parent=11 // pred_fallthru
          _
        // Predicated region
        $region17: #{tpu_custom_call.1} parent=11 // pred_check
          %p187 = pneg %p103
        $region18: #{tpu_custom_call.1} parent=11 // pred_check_branch
          %189 = sbr.rel (%p187) target = $region20
        $region19: #{tpu_custom_call.1} parent=11 // pred_region
          _
        $region20: #{tpu_custom_call.1} parent=11 // pred_fallthru
          _
      $region12: #{tpu_custom_call.1} parent=5 // pred_fallthru
        _
      %p190 = scmp.lt.s32.totalorder %s21, 2
      // Predicated region
      $region21: #{tpu_custom_call.1} parent=5 // pred_check
        %p191 = pneg %p190
      $region22: #{tpu_custom_call.1} parent=5 // pred_check_branch
        %193 = sbr.rel (%p191) target = $region24
      $region23: #{tpu_custom_call.1} parent=5 // pred_region
        // Predicated region
        $region25: #{tpu_custom_call.1} parent=23 // pred_check
          %p194 = pneg %p55
        $region26: #{tpu_custom_call.1} parent=23 // pred_check_branch
          %196 = sbr.rel (%p194) target = $region28
        $region27: #{tpu_custom_call.1} parent=23 // pred_region
          %s197 = sand.u32 %s45, 1
          %s198 = scalar_lea.sflag [#allocation3], %s197
          %s199 = sand.u32 %s45, 1
          %s200 = smul.addr %s199, 8
          %s201 = scalar_lea.vmem [#allocation2], %s200
          %s203 = ssub.s32 128, 128
          %204 = vsyncadd %s198, %s203
          %s205 = sadd.s32 %s29, %s28
          %s206 = smul.addr %s205, 128
          %s207 = scalar_lea.hbm %s0, %s206
          %s209 = sshll.u32 %s201, 4
          %s210 = int_to_ptr.vmem [resolvable:$true] %s209
          %212 = dma.hbm_to_vmem [thread:$0]  %s207, 128, %s210, %s198
        $region28: #{tpu_custom_call.1} parent=23 // pred_fallthru
          _
      $region24: #{tpu_custom_call.1} parent=5 // pred_fallthru
        _
      %p213 = scmp.le.s32.totalorder 1, %s21
      %p214 = scmp.lt.s32.totalorder %s21, 3
      %p215 = pnand %p213, %p214
      %p216 = pneg %p215
      // Predicated region
      $region29: #{tpu_custom_call.1} parent=5 // pred_check
        _
      $region30: #{tpu_custom_call.1} parent=5 // pred_check_branch
        %218 = sbr.rel (%p215) target = $region32
      $region31: #{tpu_custom_call.1} parent=5 // pred_region
        %s219 = ssub.s32 %s21, 1
        %s220 = sand.u32 %s48, 1
        %s221 = scalar_lea.sflag [#allocation3], %s220
        %s222 = sand.u32 %s48, 1
        %s223 = smul.addr %s222, 8
        %s224 = scalar_lea.vmem [#allocation2], %s223
        // Predicated region
        $region33: #{tpu_custom_call.1} parent=31 // pred_check
          %p225 = pneg %p61
        $region34: #{tpu_custom_call.1} parent=31 // pred_check_branch
          %227 = sbr.rel (%p225) target = $region36
        $region35: #{tpu_custom_call.1} parent=31 // pred_region
          %228 = dma.done %s221, 128
        $region36: #{tpu_custom_call.1} parent=31 // pred_fallthru
          _
        // Predicated region
        $region37: #{tpu_custom_call.1} parent=31 // pred_check
          %p229 = pneg %p82
        $region38: #{tpu_custom_call.1} parent=31 // pred_check_branch
          %231 = sbr.rel (%p229) target = $region40
        $region39: #{tpu_custom_call.1} parent=31 // pred_region
          %232 = dma.done [#allocation6], 512
        $region40: #{tpu_custom_call.1} parent=31 // pred_fallthru
          _
        %s233 = sand.u32 %s48, 1
        %s234 = scalar_lea.sflag [#allocation3], %s233
        %s235 = sand.u32 %s48, 1
        %s236 = smul.addr %s235, 8
        %s237 = scalar_lea.vmem [#allocation2], %s236
        %p238 = pneg %p61
        %p239 = pneg %p58
        %p240 = pneg %p82
        %p241 = pneg %p79
        %p242 = pneg %p103
        %p243 = pneg %p100
        %p244 = pneg %p131
        %p245 = pneg %p128
        %s246 = sand.u32 %s118, 1
        %s247 = scalar_lea.sflag [#allocation4], %s246
        %s248 = sand.u32 %s118, 1
        %s249 = smul.addr %s248, 32
        %s250 = scalar_lea.vmem [#allocation7], %s249
        %p251 = pneg %p159
        %p252 = pneg %p156
        %s253 = sand.u32 %s146, 1
        %s254 = scalar_lea.sflag [#allocation9], %s253
        %s255 = sand.u32 %s146, 1
        %s256 = smul.addr %s255, 64
        %s257 = scalar_lea.vmem [#allocation8], %s256
        %v258 = vld [vmem:[%s224] sm:$0xff]
        %v259 = vld [vmem:[#allocation5] sm:$0xff]
        %v260 = vld [vmem:[#allocation5 + $0x8] sm:$0xff]
        %v261 = vld [vmem:[#allocation5 + $0x10] sm:$0xff]
        %v262 = vld [vmem:[#allocation5 + $0x18] sm:$0xff]
        %v263 = vld [vmem:[%s2] sm:$0x1]
        %v265 = vlaneseq
        %v266 = vshrl.u32 %v265, 7
        %v267 = vsub.s32 0, %v266
        %v268 = vrot.slane %v263, %v267
        %vm270 = vcmask 261120
        %v272 = vsel %vm270, %v258, 0
        %274 = vmatprep.subr.mxu0 0.0
        %275 = vmatpush1.msra.mxu0 0.0
        %276 = vmatprep.subr.mxu0 0.0
        %277 = vmatpush1.msra.mxu0 0.0
        %278 = vmatprep.subr.mxu0 0.0
        %279 = vmatpush1.msra.mxu0 0.0
        %280 = vmatprep.subr.mxu0 0.0
        %281 = vmatpush1.msra.mxu0 0.0
        %282 = vmatprep.subr.mxu0 0.0
        %283 = vmatpush1.msra.mxu0 0.0
        %284 = vmatprep.subr.mxu0 0.0
        %285 = vmatpush1.msra.mxu0 0.0
        %286 = vmatprep.subr.mxu0 0.0
        %287 = vmatpush1.msra.mxu0 0.0
        %288 = vmatprep.subr.mxu0 0.0
        %289 = vmatpush1.msra.mxu0 0.0
        %290 = vmatprep.subr.mxu0 0.0
        %291 = vmatpush1.msra.mxu0 0.0
        %292 = vmatprep.subr.mxu0 0.0
        %293 = vmatpush1.msra.mxu0 0.0
        %294 = vmatprep.subr.mxu0 0.0
        %295 = vmatpush1.msra.mxu0 0.0
        %296 = vmatprep.subr.mxu0 0.0
        %297 = vmatpush1.msra.mxu0 0.0
        %298 = vmatprep.subr.mxu0 0.0
        %299 = vmatpush1.msra.mxu0 %v262
        %300 = vmatprep.subr.mxu0 0.0
        %301 = vmatpush1.msra.mxu0 %v261
        %302 = vmatprep.subr.mxu0 0.0
        %303 = vmatpush1.msra.mxu0 %v260
        %304 = vmatprep.subr.mxu0 0.0
        %305 = vmatpush1.msra.mxu0 %v259
        %306 = vmatprep.subr.mxu0 0.0
        %307 = vmatpush2.msra.mxu0 0.0
        %308 = vmatprep.subr.mxu0 0.0
        %309 = vmatpush2.msra.mxu0 0.0
        %310 = vmatprep.subr.mxu0 0.0
        %311 = vmatpush2.msra.mxu0 0.0
        %312 = vmatprep.subr.mxu0 0.0
        %313 = vmatpush2.msra.mxu0 0.0
        %314 = vmatprep.subr.mxu0 0.0
        %315 = vmatpush2.msra.mxu0 0.0
        %316 = vmatprep.subr.mxu0 0.0
        %317 = vmatpush2.msra.mxu0 0.0
        %318 = vmatprep.subr.mxu0 0.0
        %319 = vmatpush2.msra.mxu0 0.0
        %320 = vmatprep.subr.mxu0 0.0
        %321 = vmatpush2.msra.mxu0 0.0
        %322 = vmatprep.subr.mxu0 0.0
        %323 = vmatpush2.msra.mxu0 0.0
        %324 = vmatprep.subr.mxu0 0.0
        %325 = vmatpush2.msra.mxu0 0.0
        %326 = vmatprep.subr.mxu0 0.0
        %327 = vmatpush2.msra.mxu0 0.0
        %328 = vmatprep.subr.mxu0 0.0
        %329 = vmatpush2.msra.mxu0 0.0
        %330 = vmatprep.subr.mxu0 0.0
        %331 = vmatpush2.msra.mxu0 0.0
        %332 = vmatprep.subr.mxu0 0.0
        %333 = vmatpush2.msra.mxu0 0.0
        %334 = vmatprep.subr.mxu0 0.0
        %335 = vmatpush2.msra.mxu0 0.0
        %336 = vmatprep.subr.mxu0 0.0
        %337 = vmatpush2.msra.mxu0 0.0
        %338 = vmatprep.mubr.f32.mxu0 0.0
        %339 = vmatmul.mubr.f32.gmra.mxu0 %v272
        %v340 = vpop.f32.mrf.mxu0
        %v341 = vadd.f32 %v268, %v340
        %v342 = vpop.f32.mrf.mxu0
        %343 = vdwg.mxu0
        %vm344 = vcmask 64512
        %345 = vst.msk [vmem:[%s250] sm:$0xff] %vm344, %v341
        %347 = vrot.lane.b32.xlu0 %v341, 96
        %v348 = vpop.permute.xlu0 %347
        %350 = vst.msk [vmem:[%s257] sm:$0xff] %vm344, %v348
        %351 = vrot.lane.b32.xlu0 %v341, 64
        %v352 = vpop.permute.xlu0 %351
        %s354 = scalar_lea.vmem %s257, 32 [#allocation8]
        %355 = vst.msk [vmem:[%s354] sm:$0xff] %vm344, %v352
        %356 = vrot.lane.b32.xlu0 %v341, 120
        %v357 = vpop.permute.xlu0 %356
        %s359 = scalar_lea.vmem %s250, 8 [#allocation7]
        %360 = vst.msk [vmem:[%s359] sm:$0xff] %vm344, %v357
        %361 = vrot.lane.b32.xlu0 %v341, 88
        %v362 = vpop.permute.xlu0 %361
        %s364 = scalar_lea.vmem %s257, 8 [#allocation8]
        %365 = vst.msk [vmem:[%s364] sm:$0xff] %vm344, %v362
        %366 = vrot.lane.b32.xlu0 %v341, 56
        %v367 = vpop.permute.xlu0 %366
        %s369 = scalar_lea.vmem %s257, 40 [#allocation8]
        %370 = vst.msk [vmem:[%s369] sm:$0xff] %vm344, %v367
        %371 = vrot.lane.b32.xlu0 %v341, 112
        %v372 = vpop.permute.xlu0 %371
        %s374 = scalar_lea.vmem %s250, 16 [#allocation7]
        %375 = vst.msk [vmem:[%s374] sm:$0xff] %vm344, %v372
        %376 = vrot.lane.b32.xlu0 %v341, 80
        %v377 = vpop.permute.xlu0 %376
        %s379 = scalar_lea.vmem %s257, 16 [#allocation8]
        %380 = vst.msk [vmem:[%s379] sm:$0xff] %vm344, %v377
        %381 = vrot.lane.b32.xlu0 %v341, 48
        %v382 = vpop.permute.xlu0 %381
        %s384 = scalar_lea.vmem %s257, 48 [#allocation8]
        %385 = vst.msk [vmem:[%s384] sm:$0xff] %vm344, %v382
        %386 = vrot.lane.b32.xlu0 %v341, 104
        %v387 = vpop.permute.xlu0 %386
        %s389 = scalar_lea.vmem %s250, 24 [#allocation7]
        %390 = vst.msk [vmem:[%s389] sm:$0xff] %vm344, %v387
        %391 = vrot.lane.b32.xlu0 %v341, 72
        %v392 = vpop.permute.xlu0 %391
        %s394 = scalar_lea.vmem %s257, 24 [#allocation8]
        %395 = vst.msk [vmem:[%s394] sm:$0xff] %vm344, %v392
        %396 = vrot.lane.b32.xlu0 %v341, 40
        %v397 = vpop.permute.xlu0 %396
        %s399 = scalar_lea.vmem %s257, 56 [#allocation8]
        %400 = vst.msk [vmem:[%s399] sm:$0xff] %vm344, %v397
        %s401 = sand.u32 %s118, 1
        %s402 = scalar_lea.sflag [#allocation4], %s401
        %s403 = sand.u32 %s118, 1
        %s404 = smul.addr %s403, 32
        %s405 = scalar_lea.vmem [#allocation7], %s404
        %s406 = sand.u32 %s146, 1
        %s407 = scalar_lea.sflag [#allocation9], %s406
        %s408 = sand.u32 %s146, 1
        %s409 = smul.addr %s408, 64
        %s410 = scalar_lea.vmem [#allocation8], %s409
        // Predicated region
        $region41: #{tpu_custom_call.1} parent=31 // pred_check
          %p411 = pneg %p128
        $region42: #{tpu_custom_call.1} parent=31 // pred_check_branch
          %413 = sbr.rel (%p411) target = $region44
        $region43: #{tpu_custom_call.1} parent=31 // pred_region
          %s415 = ssub.s32 512, 512
          %416 = vsyncadd %s402, %s415
          %s417 = smul.addr %s30, 4
          %s418 = sadd.s32 %s31, %s417
          %s419 = smul.addr %s418, 128
          %s420 = scalar_lea.hbm %s3, %s419
          %s421 = sshll.u32 %s405, 4
          %s422 = int_to_ptr.vmem [resolvable:$true] %s421
          %427 = dma.vmem_to_hbm [thread:$0]  %s422, 512, %s420, %s402, 128, 128, 8
        $region44: #{tpu_custom_call.1} parent=31 // pred_fallthru
          _
        // Predicated region
        $region45: #{tpu_custom_call.1} parent=31 // pred_check
          %p428 = pneg %p156
        $region46: #{tpu_custom_call.1} parent=31 // pred_check_branch
          %430 = sbr.rel (%p428) target = $region48
        $region47: #{tpu_custom_call.1} parent=31 // pred_region
          #allocation11 [shape = 'u32[6]{0}', space=smem, size = 0x18, scoped, tag = 'DMA stride descriptor']
          %s432 = ssub.s32 1024, 1024
          %433 = vsyncadd %s407, %s432
          %s434 = smul.addr %s30, 4
          %s435 = sadd.s32 %s31, %s434
          %s436 = smul.addr %s435, 128
          %s437 = scalar_lea.hbm %s4, %s436
          %s439 = sshll.u32 1, 14
          %s440 = sxor.u32 4294967295, %s439
          %s443 = sshll.u32 7, 18
          %s444 = sxor.u32 4294967295, %s443
          %s445 = sand.u32 0, %s444
          %s447 = sor.u32 %s445, 0
          %s448 = sshll.u32 %s410, 4
          %s449 = int_to_ptr.vmem [resolvable:$true] %s448
          %455 = sst [smem:[#allocation11]] 512
          %s456 = scalar_lea.smem [#allocation11], 1
          %457 = sst [smem:[%s456]] 1024
          %s458 = scalar_lea.smem [#allocation11], 2
          %459 = sst [smem:[%s458]] 4
          %s460 = scalar_lea.smem [#allocation11], 3
          %461 = sst [smem:[%s460]] 128
          %s462 = scalar_lea.smem [#allocation11], 4
          %463 = sst [smem:[%s462]] 128
          %s464 = scalar_lea.smem [#allocation11], 5
          %465 = sst [smem:[%s464]] 8
          %467 = dma.general %s449, 1024, %s437, %s407, 131072, [#allocation11], %s447, 0
        $region48: #{tpu_custom_call.1} parent=31 // pred_fallthru
          _
      $region32: #{tpu_custom_call.1} parent=5 // pred_fallthru
        _
      %p468 = scmp.le.s32.totalorder 2, %s21
      // Predicated region
      $region49: #{tpu_custom_call.1} parent=5 // pred_check
        %p469 = pneg %p468
      $region50: #{tpu_custom_call.1} parent=5 // pred_check_branch
        %471 = sbr.rel (%p469) target = $region52
      $region51: #{tpu_custom_call.1} parent=5 // pred_region
        %s472 = ssub.s32 %s21, 2
        // Predicated region
        $region53: #{tpu_custom_call.1} parent=51 // pred_check
          %p473 = pneg %p134
        $region54: #{tpu_custom_call.1} parent=51 // pred_check_branch
          %475 = sbr.rel (%p473) target = $region56
        $region55: #{tpu_custom_call.1} parent=51 // pred_region
          %s476 = sand.u32 %s119, 1
          %s477 = scalar_lea.sflag [#allocation4], %s476
          %s478 = sand.u32 %s119, 1
          %s479 = smul.addr %s478, 32
          %s480 = scalar_lea.vmem [#allocation7], %s479
          %481 = dma.done %s477, 512
        $region56: #{tpu_custom_call.1} parent=51 // pred_fallthru
          _
        // Predicated region
        $region57: #{tpu_custom_call.1} parent=51 // pred_check
          %p482 = pneg %p162
        $region58: #{tpu_custom_call.1} parent=51 // pred_check_branch
          %484 = sbr.rel (%p482) target = $region60
        $region59: #{tpu_custom_call.1} parent=51 // pred_region
          %s485 = sand.u32 %s147, 1
          %s486 = scalar_lea.sflag [#allocation9], %s485
          %s487 = sand.u32 %s147, 1
          %s488 = smul.addr %s487, 64
          %s489 = scalar_lea.vmem [#allocation8], %s488
          %490 = dma.done %s486, 1024
        $region60: #{tpu_custom_call.1} parent=51 // pred_fallthru
          _
      $region52: #{tpu_custom_call.1} parent=5 // pred_fallthru
        _
    $region6: #{tpu_custom_call.1} parent=1 // loop_footer
      %s25 = sadd.s32 1, %s21
    $region7: #{tpu_custom_call.1} parent=1 // loop_footer_branch
      %20 = sbr.rel target = $region3
    $region8: #{tpu_custom_call.1} parent=1 // loop_exit
      _
    %491 = vsyncpa [#allocation3], 1
    %s492 = scalar_lea.sflag [#allocation3], 1
    %493 = vsyncpa %s492, 1
    %494 = vsyncpa [#allocation6], 1
    %495 = vsyncpa [#allocation4], 1
    %s496 = scalar_lea.sflag [#allocation4], 1
    %497 = vsyncpa %s496, 1
    %498 = vsyncpa [#allocation9], 1
    %s499 = scalar_lea.sflag [#allocation9], 1
    %500 = vsyncpa %s499, 1

</llo_original>
